<compile_context>
chip_gen: v7x
topology: tpu7x:2x2x1
jax: 0.10.0
libtpu: 0.0.40
codegen_flags: <defaults>
</compile_context>

<pallas_src>
import functools

import numpy as np
import jax
import jax.numpy as jnp
from jax.experimental import pallas as pl
from jax.experimental.pallas import tpu as pltpu


def fm_kernel(idx_ref, tbl_ref, bias_ref, out_ref, *, d):
    # idx_ref : (F, TB)   int32  VMEM  -- global row ids, batch on lanes
    # tbl_ref : (Rp, Vp)  bf16   VMEM  -- augmented table (resident), Rp>=3D+3
    # bias_ref: (1,)      f32    SMEM  -- scalar bias
    # out_ref : (1, TB)   f32    VMEM  -- lane-dense per-row result
    nf, tb = idx_ref.shape
    _, vp = tbl_ref.shape

    # Multi-hot field-count matrix: mh[v, b] = #fields of row b with id v.
    iota_v = jax.lax.broadcasted_iota(jnp.int32, (vp, tb), 0)
    mh = jnp.zeros((vp, tb), jnp.float32)
    for f in range(nf):                                  # F tiny & static -> unrolled
        col = idx_ref[pl.ds(f, 1), :]                    # (1, TB) int32
        mh = mh + (iota_v == col).astype(jnp.float32)    # compare+select, no bf16 math

    # One MXU matmul does gather + sum-over-fields for emb, emb^2 and fc.
    # bf16 table x {0,1,...,F} counts: every product exact, accumulation f32.
    res = jnp.dot(tbl_ref[...], mh.astype(jnp.bfloat16),
                  preferred_element_type=jnp.float32)    # (Rp, TB) f32

    sum_f = res[0:d, :]                                  # (D, TB)  sum_f emb
    sum_sq = res[d:2 * d, :] + res[2 * d:3 * d, :]       # (D, TB)  sum_f emb^2 (exact)
    lin = res[3 * d:3 * d + 3, :]                        # (3, TB)  fc hi/mid/lo parts

    # FM 2nd-order term on the VPU: 0.5 * sum_d[(sum_f emb)^2 - sum_f emb^2]
    ix = 0.5 * jnp.sum(sum_f * sum_f - sum_sq, axis=0, keepdims=True)   # (1, TB)
    out_ref[...] = jnp.sum(lin, axis=0, keepdims=True) + ix + bias_ref[0]


def _split_bf16(x_f32, n_terms):
    """Exact decomposition of f32 values into a sum of n_terms bf16 arrays."""
    parts = []
    r = x_f32
    for _ in range(n_terms):
        p = r.astype(jnp.bfloat16)
        parts.append(p)
        r = r - p.astype(jnp.float32)
    return parts


def fm_forward(x_idx, emb_table, fc_table, bias, offsets, *, block_b=256):
    """FM forward.

    x_idx:     (B, F) int32 field-local indices
    emb_table: (V, D) bf16/float embedding weight
    fc_table:  (V, 1) float32 linear weight
    bias:      (1,)   float32
    offsets:   (F,)   int32   per-field offsets
    Returns (B,) float32.
    """
    B, F = x_idx.shape
    V, D = emb_table.shape

    # ---- cheap, index-only glue (no per-row feature data materialized) ----
    idx = x_idx.astype(jnp.int32) + offsets[None, :].astype(jnp.int32)  # (B, F)
    idx_t = idx.T                                                       # (F, B): batch on lanes

    # Pad batch to a tile multiple (padded rows reuse index 0, sliced off later).
    Bp = int(block_b * pl.cdiv(B, block_b))
    if Bp != B:
        idx_t = jnp.pad(idx_t, ((0, 0), (0, Bp - B)))

    # ---- build the augmented, exactly-decomposed table (tiny, once per call) ----
    emb_bf = emb_table.astype(jnp.bfloat16)                     # (V, D) bf16
    emb_f32 = emb_bf.astype(jnp.float32)
    sq_hi, sq_lo = _split_bf16(emb_f32 * emb_f32, 2)            # exact: E^2 = hi + lo
    fc_hi, fc_mid, fc_lo = _split_bf16(fc_table.astype(jnp.float32), 3)  # exact f32 fc

    aug = jnp.concatenate(
        [emb_bf.T, sq_hi.T, sq_lo.T, fc_hi.T, fc_mid.T, fc_lo.T], axis=0)  # (3D+3, V) bf16
    R = 3 * D + 3
    Rp = int(8 * pl.cdiv(R, 8))
    Vp = int(128 * pl.cdiv(V, 128))
    tbl_aug = jnp.zeros((Rp, Vp), jnp.bfloat16).at[:R, :V].set(aug)

    nb = Bp // block_b
    kernel = functools.partial(fm_kernel, d=D)
    out = pl.pallas_call(
        kernel,
        out_shape=jax.ShapeDtypeStruct((1, Bp), jnp.float32),
        grid=(nb,),
        in_specs=[
            # Per-tile indices: the only HBM stream that scales with batch.
            pl.BlockSpec((F, block_b), lambda i: (0, i)),
            # Resident augmented table: constant block index -> DMA'd once.
            pl.BlockSpec((Rp, Vp), lambda i: (0, 0)),
            # Scalar bias in SMEM.
            pl.BlockSpec(memory_space=pltpu.MemorySpace.SMEM),
        ],
        # Lane-dense output block (batch on lanes) -> unmasked vector stores.
        out_specs=pl.BlockSpec((1, block_b), lambda i: (0, i)),
        compiler_params=pltpu.CompilerParams(
            dimension_semantics=("parallel",),   # batch tiles across TCs (v7x)
        ),
    )(idx_t, tbl_aug, bias.astype(jnp.float32))

    return out[0, :B]                                                   # (B,)


if __name__ == "__main__":
    # Small, deterministic setup consistent with the module.
    field_dims = (3, 4, 5)          # sum = 12 embedding rows
    embed_dim = 16
    batch = 200                     # non-multiple of the batch tile (exercises padding)
    num_fields = len(field_dims)
    vocab = int(np.sum(field_dims))

    key = jax.random.PRNGKey(0)
    k_emb, k_fc, k_x = jax.random.split(key, 3)

    # FeaturesEmbedding weight: xavier_uniform_ on (vocab, embed_dim); stored bf16.
    bound = float(np.sqrt(6.0 / (vocab + embed_dim)))
    emb_table_f32 = jax.random.uniform(k_emb, (vocab, embed_dim),
                                       dtype=jnp.float32,
                                       minval=-bound, maxval=bound)
    emb_table = emb_table_f32.astype(jnp.bfloat16)     # bf16 storage, f32 accumulation

    # FeaturesLinear fc weight: default torch.nn.Embedding init ~ N(0, 1); f32.
    fc_table = jax.random.normal(k_fc, (vocab, 1), dtype=jnp.float32)
    bias = jnp.zeros((1,), dtype=jnp.float32)

    offsets = jnp.array(np.concatenate([[0], np.cumsum(field_dims)[:-1]]),
                        dtype=jnp.int32)

    # Field-local indices: x[:, f] in [0, field_dims[f])
    ks = jax.random.split(k_x, num_fields)
    x_cols = [jax.random.randint(ks[f], (batch,), 0, field_dims[f], dtype=jnp.int32)
              for f in range(num_fields)]
    x_idx = jnp.stack(x_cols, axis=1)                   # (B, F) int32

    out = fm_forward(x_idx, emb_table, fc_table, bias, offsets)
    out = jax.block_until_ready(out)

    # Pure-JAX reference (same bf16-stored embedding weights, f32 math throughout).
    idx = x_idx + offsets[None, :]
    emb = jnp.take(emb_table.astype(jnp.float32), idx, axis=0)     # (B, F, D)
    lin = jnp.sum(jnp.take(fc_table[:, 0], idx, axis=0), axis=1) + bias[0]
    sos = jnp.sum(emb, axis=1) ** 2
    ssq = jnp.sum(emb ** 2, axis=1)
    ref = lin + 0.5 * jnp.sum(sos - ssq, axis=1)

    assert out.shape == (batch,)
    np.testing.assert_allclose(np.asarray(out), np.asarray(ref),
                               rtol=5e-5, atol=5e-5)

    print("KERNEL_OK")
</pallas_src>

<mosaic_0001>
module attributes {stable_mosaic.version = 11 : i64} {
  func.func @fm_kernel(%arg0: i32, %arg1: memref<3x256xi32, #tpu.memory_space<vmem>>, %arg2: memref<56x128xbf16, #tpu.memory_space<vmem>>, %arg3: memref<1xf32, #tpu.memory_space<smem>>, %arg4: memref<1x256xf32, #tpu.memory_space<vmem>>) attributes {dimension_semantics = [#tpu.dimension_semantics<parallel>], iteration_bounds = array<i64: 1>, scalar_prefetch = 0 : i64, scratch_operands = 0 : i64, tpu.core_type = #tpu.core_type<tc>, window_params = [{transform_indices = @transform_0, window_bounds = array<i64: 3, 256>}, {pipeline_mode = #tpu.pipeline_mode<synchronous>, transform_indices = @transform_1, window_bounds = array<i64: 56, 128>}, {transform_indices = @transform_2, window_bounds = array<i64: 1>}, {transform_indices = @transform_3, window_bounds = array<i64: 1, 256>}]} {
    %0 = tpu.iota {dimensions = array<i32: 0>} : vector<128x256xi32>
    %cst = arith.constant 0.000000e+00 : f32
    %1 = vector.broadcast %cst : f32 to vector<128x256xf32>
    %c0 = arith.constant 0 : index
    %c0_0 = arith.constant 0 : index
    %2 = vector.load %arg1[%c0, %c0_0] : memref<3x256xi32, #tpu.memory_space<vmem>>, vector<1x256xi32>
    %3 = vector.broadcast %2 : vector<1x256xi32> to vector<128x256xi32>
    %4 = arith.cmpi eq, %0, %3 : vector<128x256xi32>
    %5 = arith.extui %4 : vector<128x256xi1> to vector<128x256xi32>
    %6 = arith.sitofp %5 : vector<128x256xi32> to vector<128x256xf32>
    %7 = arith.addf %1, %6 : vector<128x256xf32>
    %c1 = arith.constant 1 : index
    %c0_1 = arith.constant 0 : index
    %8 = vector.load %arg1[%c1, %c0_1] : memref<3x256xi32, #tpu.memory_space<vmem>>, vector<1x256xi32>
    %9 = vector.broadcast %8 : vector<1x256xi32> to vector<128x256xi32>
    %10 = arith.cmpi eq, %0, %9 : vector<128x256xi32>
    %11 = arith.extui %10 : vector<128x256xi1> to vector<128x256xi32>
    %12 = arith.sitofp %11 : vector<128x256xi32> to vector<128x256xf32>
    %13 = arith.addf %7, %12 : vector<128x256xf32>
    %c2 = arith.constant 2 : index
    %c0_2 = arith.constant 0 : index
    %14 = vector.load %arg1[%c2, %c0_2] : memref<3x256xi32, #tpu.memory_space<vmem>>, vector<1x256xi32>
    %15 = vector.broadcast %14 : vector<1x256xi32> to vector<128x256xi32>
    %16 = arith.cmpi eq, %0, %15 : vector<128x256xi32>
    %17 = arith.extui %16 : vector<128x256xi1> to vector<128x256xi32>
    %18 = arith.sitofp %17 : vector<128x256xi32> to vector<128x256xf32>
    %19 = arith.addf %13, %18 : vector<128x256xf32>
    %c0_3 = arith.constant 0 : index
    %c0_4 = arith.constant 0 : index
    %20 = vector.load %arg2[%c0_3, %c0_4] : memref<56x128xbf16, #tpu.memory_space<vmem>>, vector<56x128xbf16>
    %21 = arith.truncf %19 : vector<128x256xf32> to vector<128x256xbf16>
    %cst_5 = arith.constant dense<0.000000e+00> : vector<56x256xf32>
    %22 = tpu.matmul %20, %21, %cst_5 {dimension_numbers = #tpu.dot_dimension_numbers<[1], [0], [0], [1], [0, 0, 1, 1], [], []>} : vector<56x128xbf16>, vector<128x256xbf16>, vector<56x256xf32> -> vector<56x256xf32>
    %23 = vector.extract_strided_slice %22 {offsets = [0, 0], sizes = [16, 256], strides = [1, 1]} : vector<56x256xf32> to vector<16x256xf32>
    %24 = vector.extract_strided_slice %22 {offsets = [16, 0], sizes = [16, 256], strides = [1, 1]} : vector<56x256xf32> to vector<16x256xf32>
    %25 = vector.extract_strided_slice %22 {offsets = [32, 0], sizes = [16, 256], strides = [1, 1]} : vector<56x256xf32> to vector<16x256xf32>
    %26 = arith.addf %24, %25 : vector<16x256xf32>
    %27 = vector.extract_strided_slice %22 {offsets = [48, 0], sizes = [3, 256], strides = [1, 1]} : vector<56x256xf32> to vector<3x256xf32>
    %28 = arith.mulf %23, %23 : vector<16x256xf32>
    %29 = arith.subf %28, %26 : vector<16x256xf32>
    %cst_6 = arith.constant dense<0.000000e+00> : vector<256xf32>
    %30 = vector.multi_reduction <add>, %29, %cst_6 [0] : vector<16x256xf32> to vector<256xf32>
    %31 = vector.shape_cast %30 : vector<256xf32> to vector<1x256xf32>
    %cst_7 = arith.constant 5.000000e-01 : f32
    %32 = vector.broadcast %cst_7 : f32 to vector<1x256xf32>
    %33 = arith.mulf %32, %31 : vector<1x256xf32>
    %cst_8 = arith.constant dense<0.000000e+00> : vector<256xf32>
    %34 = vector.multi_reduction <add>, %27, %cst_8 [0] : vector<3x256xf32> to vector<256xf32>
    %35 = vector.shape_cast %34 : vector<256xf32> to vector<1x256xf32>
    %36 = arith.addf %35, %33 : vector<1x256xf32>
    %c0_9 = arith.constant 0 : index
    %37 = memref.load %arg3[%c0_9] : memref<1xf32, #tpu.memory_space<smem>>
    %38 = vector.broadcast %37 : f32 to vector<1x256xf32>
    %39 = arith.addf %36, %38 : vector<1x256xf32>
    %c0_10 = arith.constant 0 : index
    %c0_11 = arith.constant 0 : index
    %40 = vector.load %arg4[%c0_10, %c0_11] : memref<1x256xf32, #tpu.memory_space<vmem>>, vector<1x256xf32>
    tpu.vector_store %arg4[%c0_10, %c0_11], %39 {strides = array<i32>} : memref<1x256xf32, #tpu.memory_space<vmem>>, vector<1x256xf32>,
    return
  }
  func.func @transform_0(%arg0: i32) -> (i32, i32) {
    %c0_i32 = arith.constant 0 : i32
    %c0_i32_0 = arith.constant 0 : i32
    return %c0_i32, %arg0 : i32, i32
  }
  func.func @transform_1(%arg0: i32) -> (i32, i32) {
    %c0_i32 = arith.constant 0 : i32
    %c0_i32_0 = arith.constant 0 : i32
    %c0_i32_1 = arith.constant 0 : i32
    return %c0_i32, %c0_i32_0 : i32, i32
  }
  func.func @transform_2(%arg0: i32) -> i32 {
    %c0_i32 = arith.constant 0 : i32
    %c0_i32_0 = arith.constant 0 : i32
    return %c0_i32 : i32
  }
  func.func @transform_3(%arg0: i32) -> (i32, i32) {
    %c0_i32 = arith.constant 0 : i32
    %c0_i32_0 = arith.constant 0 : i32
    return %c0_i32, %arg0 : i32, i32
  }
}

</mosaic_0001>

<llo_original>
// kernel: tpu_custom_call.1
$region0: #{tpu_custom_call.1}
  #allocation0 [shape = 'u32[]', space=smem, size = 0x4, offset = 0x4, fixed_abs, tag = 'smem constant byte address 0x4 - core index']
  #allocation1 [shape = 'u32[144,128]{1,0:T(1,128)}', space=vmem, size = 0x12000, scoped, tag = 'internal scratch']
  #allocation2 [shape = 'f32[1]{0:T(128)S(6)}', space=smem, size = 0x200, scoped, tag = 'scoped memory for tpu_custom_call.1']
  %s0 = inlined_call_operand.hbm [shape: s32[3,256], index: 0, kind: input, shape index: {}]
  %s1 = inlined_call_operand.hbm [shape: bf16[56,128], index: 1, kind: input, shape index: {}]
  %s2 = inlined_call_operand.<no memory space> [shape: f32[1], index: 2, kind: input, shape index: {}]
  %s3 = inlined_call_operand.hbm [shape: f32[1,256], index: 3, kind: output, shape index: {}]
  %s4 = sld [smem:[#allocation0]]
  $region30: #{tpu_custom_call.1} parent=0
    _
  %s6 = ssub.s32 1, %s4
  %s7 = scalar_select 0, %s6, %s4
  %8 = sst [smem:[#allocation2]] %s2
  $region1: #{tpu_custom_call.1} parent=0
    #allocation3 [shape = 'u8[4096]{0}', space=vmem, size = 0x1000, scoped, tag = 'input window, operand 0, single buffered']
    #allocation4 [shape = 's32[1]{0}', space=sflag, size = 0x4, scoped, tag = 'scoped memory for tpu_custom_call.1']
    #allocation5 [shape = 's32[1]{0}', space=sflag, size = 0x4, scoped, tag = 'scoped memory for tpu_custom_call.1']
    #allocation6 [shape = 'u8[14336]{0}', space=vmem, size = 0x3800, scoped, tag = 'input window, operand 1, single buffered']
    #allocation7 [shape = 's32[1]{0}', space=sflag, size = 0x4, scoped, tag = 'scoped memory for tpu_custom_call.1']
    #allocation8 [shape = 'u8[1024]{0}', space=vmem, size = 0x400, scoped, tag = 'output window, operand 0, single buffered']
    %9 = vsyncpa [#allocation4], 0
    %10 = vsyncpa [#allocation7], 0
    %11 = vsyncpa [#allocation5], 0
    // Predicated region
    $region2: #{tpu_custom_call.1} parent=1 // pred_check
      _
    $region3: #{tpu_custom_call.1} parent=1 // pred_check_branch
      %13 = sbr.rel (0) target = $region5
    $region4: #{tpu_custom_call.1} parent=1 // pred_region
      %s15 = ssub.s32 128, 128
      %16 = vsyncadd [#allocation4], %s15
      %s18 = sshll.u32 [#allocation3], 4
      %s19 = int_to_ptr.vmem [resolvable:$true] %s18
      %21 = dma.hbm_to_vmem [thread:$0]  %s0, 128, %s19, [#allocation4]
    $region5: #{tpu_custom_call.1} parent=1 // pred_fallthru
      _
    // Predicated region
    $region6: #{tpu_custom_call.1} parent=1 // pred_check
      _
    $region7: #{tpu_custom_call.1} parent=1 // pred_check_branch
      %23 = sbr.rel (0) target = $region9
    $region8: #{tpu_custom_call.1} parent=1 // pred_region
      %s25 = ssub.s32 448, 448
      %26 = vsyncadd [#allocation7], %s25
      %s27 = sshll.u32 [#allocation6], 4
      %s28 = int_to_ptr.vmem [resolvable:$true] %s27
      %33 = dma.hbm_to_vmem [thread:$0]  %s1, 448, %s28, [#allocation7], 64, 64, 4
    $region9: #{tpu_custom_call.1} parent=1 // pred_fallthru
      _
    // Predicated region
    $region10: #{tpu_custom_call.1} parent=1 // pred_check
      _
    $region11: #{tpu_custom_call.1} parent=1 // pred_check_branch
      %35 = sbr.rel (0) target = $region13
    $region12: #{tpu_custom_call.1} parent=1 // pred_region
      _
    $region13: #{tpu_custom_call.1} parent=1 // pred_fallthru
      _
    // Predicated region
    $region14: #{tpu_custom_call.1} parent=1 // pred_check
      _
    $region15: #{tpu_custom_call.1} parent=1 // pred_check_branch
      %37 = sbr.rel (0) target = $region17
    $region16: #{tpu_custom_call.1} parent=1 // pred_region
      %38 = dma.done [#allocation4], 128
    $region17: #{tpu_custom_call.1} parent=1 // pred_fallthru
      _
    // Predicated region
    $region18: #{tpu_custom_call.1} parent=1 // pred_check
      _
    $region19: #{tpu_custom_call.1} parent=1 // pred_check_branch
      %40 = sbr.rel (0) target = $region21
    $region20: #{tpu_custom_call.1} parent=1 // pred_region
      %41 = dma.done [#allocation7], 448
    $region21: #{tpu_custom_call.1} parent=1 // pred_fallthru
      _
    %v43 = vlaneseq
    %v44 = vshrl.u32 %v43, 7
    %v45 = vadd.s32 %v44, 8
    %v46 = vadd.s32 %v44, 16
    %v47 = vadd.s32 %v44, 24
    %v48 = vadd.s32 %v44, 32
    %v49 = vadd.s32 %v44, 40
    %v50 = vadd.s32 %v44, 48
    %v51 = vadd.s32 %v44, 56
    %v52 = vadd.s32 %v44, 64
    %v53 = vadd.s32 %v44, 72
    %v54 = vadd.s32 %v44, 80
    %v55 = vadd.s32 %v44, 88
    %v56 = vadd.s32 %v44, 96
    %v57 = vadd.s32 %v44, 104
    %v58 = vadd.s32 %v44, 112
    %v59 = vadd.s32 %v44, 120
    %v60 = vld [vmem:[#allocation3] ss:$4 sm:$0x3]
    %v61 = vlaneseq
    %v62 = vshrl.u32 %v61, 7
    %v63 = vsub.s32 0, %v62
    %v64 = vrot.slane %v60, %v63
    %v65 = vlaneseq
    %v66 = vshrl.u32 %v65, 7
    %v67 = vsub.s32 1, %v66
    %v68 = vrot.slane %v60, %v67
    %vm69 = vcmp.eq.s32.totalorder %v44, %v64
    %vm70 = vcmp.eq.s32.totalorder %v44, %v68
    %vm71 = vcmp.eq.s32.totalorder %v45, %v64
    %vm72 = vcmp.eq.s32.totalorder %v45, %v68
    %vm73 = vcmp.eq.s32.totalorder %v46, %v64
    %vm74 = vcmp.eq.s32.totalorder %v46, %v68
    %vm75 = vcmp.eq.s32.totalorder %v47, %v64
    %vm76 = vcmp.eq.s32.totalorder %v47, %v68
    %vm77 = vcmp.eq.s32.totalorder %v48, %v64
    %vm78 = vcmp.eq.s32.totalorder %v48, %v68
    %vm79 = vcmp.eq.s32.totalorder %v49, %v64
    %vm80 = vcmp.eq.s32.totalorder %v49, %v68
    %vm81 = vcmp.eq.s32.totalorder %v50, %v64
    %vm82 = vcmp.eq.s32.totalorder %v50, %v68
    %vm83 = vcmp.eq.s32.totalorder %v51, %v64
    %vm84 = vcmp.eq.s32.totalorder %v51, %v68
    %vm85 = vcmp.eq.s32.totalorder %v52, %v64
    %vm86 = vcmp.eq.s32.totalorder %v52, %v68
    %vm87 = vcmp.eq.s32.totalorder %v53, %v64
    %vm88 = vcmp.eq.s32.totalorder %v53, %v68
    %vm89 = vcmp.eq.s32.totalorder %v54, %v64
    %vm90 = vcmp.eq.s32.totalorder %v54, %v68
    %vm91 = vcmp.eq.s32.totalorder %v55, %v64
    %vm92 = vcmp.eq.s32.totalorder %v55, %v68
    %vm93 = vcmp.eq.s32.totalorder %v56, %v64
    %vm94 = vcmp.eq.s32.totalorder %v56, %v68
    %vm95 = vcmp.eq.s32.totalorder %v57, %v64
    %vm96 = vcmp.eq.s32.totalorder %v57, %v68
    %vm97 = vcmp.eq.s32.totalorder %v58, %v64
    %vm98 = vcmp.eq.s32.totalorder %v58, %v68
    %vm99 = vcmp.eq.s32.totalorder %v59, %v64
    %vm100 = vcmp.eq.s32.totalorder %v59, %v68
    %v101 = vsel %vm69, 1, 0
    %v102 = vsel %vm70, 1, 0
    %v103 = vsel %vm71, 1, 0
    %v104 = vsel %vm72, 1, 0
    %v105 = vsel %vm73, 1, 0
    %v106 = vsel %vm74, 1, 0
    %v107 = vsel %vm75, 1, 0
    %v108 = vsel %vm76, 1, 0
    %v109 = vsel %vm77, 1, 0
    %v110 = vsel %vm78, 1, 0
    %v111 = vsel %vm79, 1, 0
    %v112 = vsel %vm80, 1, 0
    %v113 = vsel %vm81, 1, 0
    %v114 = vsel %vm82, 1, 0
    %v115 = vsel %vm83, 1, 0
    %v116 = vsel %vm84, 1, 0
    %v117 = vsel %vm85, 1, 0
    %v118 = vsel %vm86, 1, 0
    %v119 = vsel %vm87, 1, 0
    %v120 = vsel %vm88, 1, 0
    %v121 = vsel %vm89, 1, 0
    %v122 = vsel %vm90, 1, 0
    %v123 = vsel %vm91, 1, 0
    %v124 = vsel %vm92, 1, 0
    %v125 = vsel %vm93, 1, 0
    %v126 = vsel %vm94, 1, 0
    %v127 = vsel %vm95, 1, 0
    %v128 = vsel %vm96, 1, 0
    %v129 = vsel %vm97, 1, 0
    %v130 = vsel %vm98, 1, 0
    %v131 = vsel %vm99, 1, 0
    %v132 = vsel %vm100, 1, 0
    %v133 = vcvt.s32.f32 %v101
    %v134 = vcvt.s32.f32 %v102
    %v135 = vcvt.s32.f32 %v103
    %v136 = vcvt.s32.f32 %v104
    %v137 = vcvt.s32.f32 %v105
    %v138 = vcvt.s32.f32 %v106
    %v139 = vcvt.s32.f32 %v107
    %v140 = vcvt.s32.f32 %v108
    %v141 = vcvt.s32.f32 %v109
    %v142 = vcvt.s32.f32 %v110
    %v143 = vcvt.s32.f32 %v111
    %v144 = vcvt.s32.f32 %v112
    %v145 = vcvt.s32.f32 %v113
    %v146 = vcvt.s32.f32 %v114
    %v147 = vcvt.s32.f32 %v115
    %v148 = vcvt.s32.f32 %v116
    %v149 = vcvt.s32.f32 %v117
    %v150 = vcvt.s32.f32 %v118
    %v151 = vcvt.s32.f32 %v119
    %v152 = vcvt.s32.f32 %v120
    %v153 = vcvt.s32.f32 %v121
    %v154 = vcvt.s32.f32 %v122
    %v155 = vcvt.s32.f32 %v123
    %v156 = vcvt.s32.f32 %v124
    %v157 = vcvt.s32.f32 %v125
    %v158 = vcvt.s32.f32 %v126
    %v159 = vcvt.s32.f32 %v127
    %v160 = vcvt.s32.f32 %v128
    %v161 = vcvt.s32.f32 %v129
    %v162 = vcvt.s32.f32 %v130
    %v163 = vcvt.s32.f32 %v131
    %v164 = vcvt.s32.f32 %v132
    %v165 = vadd.f32 %v133, 0.0
    %v166 = vadd.f32 %v134, 0.0
    %v167 = vadd.f32 %v135, 0.0
    %v168 = vadd.f32 %v136, 0.0
    %v169 = vadd.f32 %v137, 0.0
    %v170 = vadd.f32 %v138, 0.0
    %v171 = vadd.f32 %v139, 0.0
    %v172 = vadd.f32 %v140, 0.0
    %v173 = vadd.f32 %v141, 0.0
    %v174 = vadd.f32 %v142, 0.0
    %v175 = vadd.f32 %v143, 0.0
    %v176 = vadd.f32 %v144, 0.0
    %v177 = vadd.f32 %v145, 0.0
    %v178 = vadd.f32 %v146, 0.0
    %v179 = vadd.f32 %v147, 0.0
    %v180 = vadd.f32 %v148, 0.0
    %v181 = vadd.f32 %v149, 0.0
    %v182 = vadd.f32 %v150, 0.0
    %v183 = vadd.f32 %v151, 0.0
    %v184 = vadd.f32 %v152, 0.0
    %v185 = vadd.f32 %v153, 0.0
    %v186 = vadd.f32 %v154, 0.0
    %v187 = vadd.f32 %v155, 0.0
    %v188 = vadd.f32 %v156, 0.0
    %v189 = vadd.f32 %v157, 0.0
    %v190 = vadd.f32 %v158, 0.0
    %v191 = vadd.f32 %v159, 0.0
    %v192 = vadd.f32 %v160, 0.0
    %v193 = vadd.f32 %v161, 0.0
    %v194 = vadd.f32 %v162, 0.0
    %v195 = vadd.f32 %v163, 0.0
    %v196 = vadd.f32 %v164, 0.0
    %s197 = scalar_lea.vmem [#allocation3], 1
    %v198 = vld [vmem:[%s197] ss:$4 sm:$0x3]
    %v199 = vlaneseq
    %v200 = vshrl.u32 %v199, 7
    %v201 = vsub.s32 0, %v200
    %v202 = vrot.slane %v198, %v201
    %v203 = vlaneseq
    %v204 = vshrl.u32 %v203, 7
    %v205 = vsub.s32 1, %v204
    %v206 = vrot.slane %v198, %v205
    %vm207 = vcmp.eq.s32.totalorder %v44, %v202
    %vm208 = vcmp.eq.s32.totalorder %v44, %v206
    %vm209 = vcmp.eq.s32.totalorder %v45, %v202
    %vm210 = vcmp.eq.s32.totalorder %v45, %v206
    %vm211 = vcmp.eq.s32.totalorder %v46, %v202
    %vm212 = vcmp.eq.s32.totalorder %v46, %v206
    %vm213 = vcmp.eq.s32.totalorder %v47, %v202
    %vm214 = vcmp.eq.s32.totalorder %v47, %v206
    %vm215 = vcmp.eq.s32.totalorder %v48, %v202
    %vm216 = vcmp.eq.s32.totalorder %v48, %v206
    %vm217 = vcmp.eq.s32.totalorder %v49, %v202
    %vm218 = vcmp.eq.s32.totalorder %v49, %v206
    %vm219 = vcmp.eq.s32.totalorder %v50, %v202
    %vm220 = vcmp.eq.s32.totalorder %v50, %v206
    %vm221 = vcmp.eq.s32.totalorder %v51, %v202
    %vm222 = vcmp.eq.s32.totalorder %v51, %v206
    %vm223 = vcmp.eq.s32.totalorder %v52, %v202
    %vm224 = vcmp.eq.s32.totalorder %v52, %v206
    %vm225 = vcmp.eq.s32.totalorder %v53, %v202
    %vm226 = vcmp.eq.s32.totalorder %v53, %v206
    %vm227 = vcmp.eq.s32.totalorder %v54, %v202
    %vm228 = vcmp.eq.s32.totalorder %v54, %v206
    %vm229 = vcmp.eq.s32.totalorder %v55, %v202
    %vm230 = vcmp.eq.s32.totalorder %v55, %v206
    %vm231 = vcmp.eq.s32.totalorder %v56, %v202
    %vm232 = vcmp.eq.s32.totalorder %v56, %v206
    %vm233 = vcmp.eq.s32.totalorder %v57, %v202
    %vm234 = vcmp.eq.s32.totalorder %v57, %v206
    %vm235 = vcmp.eq.s32.totalorder %v58, %v202
    %vm236 = vcmp.eq.s32.totalorder %v58, %v206
    %vm237 = vcmp.eq.s32.totalorder %v59, %v202
    %vm238 = vcmp.eq.s32.totalorder %v59, %v206
    %v239 = vsel %vm207, 1, 0
    %v240 = vsel %vm208, 1, 0
    %v241 = vsel %vm209, 1, 0
    %v242 = vsel %vm210, 1, 0
    %v243 = vsel %vm211, 1, 0
    %v244 = vsel %vm212, 1, 0
    %v245 = vsel %vm213, 1, 0
    %v246 = vsel %vm214, 1, 0
    %v247 = vsel %vm215, 1, 0
    %v248 = vsel %vm216, 1, 0
    %v249 = vsel %vm217, 1, 0
    %v250 = vsel %vm218, 1, 0
    %v251 = vsel %vm219, 1, 0
    %v252 = vsel %vm220, 1, 0
    %v253 = vsel %vm221, 1, 0
    %v254 = vsel %vm222, 1, 0
    %v255 = vsel %vm223, 1, 0
    %v256 = vsel %vm224, 1, 0
    %v257 = vsel %vm225, 1, 0
    %v258 = vsel %vm226, 1, 0
    %v259 = vsel %vm227, 1, 0
    %v260 = vsel %vm228, 1, 0
    %v261 = vsel %vm229, 1, 0
    %v262 = vsel %vm230, 1, 0
    %v263 = vsel %vm231, 1, 0
    %v264 = vsel %vm232, 1, 0
    %v265 = vsel %vm233, 1, 0
    %v266 = vsel %vm234, 1, 0
    %v267 = vsel %vm235, 1, 0
    %v268 = vsel %vm236, 1, 0
    %v269 = vsel %vm237, 1, 0
    %v270 = vsel %vm238, 1, 0
    %v271 = vcvt.s32.f32 %v239
    %v272 = vcvt.s32.f32 %v240
    %v273 = vcvt.s32.f32 %v241
    %v274 = vcvt.s32.f32 %v242
    %v275 = vcvt.s32.f32 %v243
    %v276 = vcvt.s32.f32 %v244
    %v277 = vcvt.s32.f32 %v245
    %v278 = vcvt.s32.f32 %v246
    %v279 = vcvt.s32.f32 %v247
    %v280 = vcvt.s32.f32 %v248
    %v281 = vcvt.s32.f32 %v249
    %v282 = vcvt.s32.f32 %v250
    %v283 = vcvt.s32.f32 %v251
    %v284 = vcvt.s32.f32 %v252
    %v285 = vcvt.s32.f32 %v253
    %v286 = vcvt.s32.f32 %v254
    %v287 = vcvt.s32.f32 %v255
    %v288 = vcvt.s32.f32 %v256
    %v289 = vcvt.s32.f32 %v257
    %v290 = vcvt.s32.f32 %v258
    %v291 = vcvt.s32.f32 %v259
    %v292 = vcvt.s32.f32 %v260
    %v293 = vcvt.s32.f32 %v261
    %v294 = vcvt.s32.f32 %v262
    %v295 = vcvt.s32.f32 %v263
    %v296 = vcvt.s32.f32 %v264
    %v297 = vcvt.s32.f32 %v265
    %v298 = vcvt.s32.f32 %v266
    %v299 = vcvt.s32.f32 %v267
    %v300 = vcvt.s32.f32 %v268
    %v301 = vcvt.s32.f32 %v269
    %v302 = vcvt.s32.f32 %v270
    %v303 = vadd.f32 %v165, %v271
    %v304 = vadd.f32 %v166, %v272
    %v305 = vadd.f32 %v167, %v273
    %v306 = vadd.f32 %v168, %v274
    %v307 = vadd.f32 %v169, %v275
    %v308 = vadd.f32 %v170, %v276
    %v309 = vadd.f32 %v171, %v277
    %v310 = vadd.f32 %v172, %v278
    %v311 = vadd.f32 %v173, %v279
    %v312 = vadd.f32 %v174, %v280
    %v313 = vadd.f32 %v175, %v281
    %v314 = vadd.f32 %v176, %v282
    %v315 = vadd.f32 %v177, %v283
    %v316 = vadd.f32 %v178, %v284
    %v317 = vadd.f32 %v179, %v285
    %v318 = vadd.f32 %v180, %v286
    %v319 = vadd.f32 %v181, %v287
    %v320 = vadd.f32 %v182, %v288
    %v321 = vadd.f32 %v183, %v289
    %v322 = vadd.f32 %v184, %v290
    %v323 = vadd.f32 %v185, %v291
    %v324 = vadd.f32 %v186, %v292
    %v325 = vadd.f32 %v187, %v293
    %v326 = vadd.f32 %v188, %v294
    %v327 = vadd.f32 %v189, %v295
    %v328 = vadd.f32 %v190, %v296
    %v329 = vadd.f32 %v191, %v297
    %v330 = vadd.f32 %v192, %v298
    %v331 = vadd.f32 %v193, %v299
    %v332 = vadd.f32 %v194, %v300
    %v333 = vadd.f32 %v195, %v301
    %v334 = vadd.f32 %v196, %v302
    %s335 = scalar_lea.vmem [#allocation3], 2
    %v336 = vld [vmem:[%s335] ss:$4 sm:$0x3]
    %v337 = vlaneseq
    %v338 = vshrl.u32 %v337, 7
    %v339 = vsub.s32 0, %v338
    %v340 = vrot.slane %v336, %v339
    %v341 = vlaneseq
    %v342 = vshrl.u32 %v341, 7
    %v343 = vsub.s32 1, %v342
    %v344 = vrot.slane %v336, %v343
    %vm345 = vcmp.eq.s32.totalorder %v44, %v340
    %vm346 = vcmp.eq.s32.totalorder %v44, %v344
    %vm347 = vcmp.eq.s32.totalorder %v45, %v340
    %vm348 = vcmp.eq.s32.totalorder %v45, %v344
    %vm349 = vcmp.eq.s32.totalorder %v46, %v340
    %vm350 = vcmp.eq.s32.totalorder %v46, %v344
    %vm351 = vcmp.eq.s32.totalorder %v47, %v340
    %vm352 = vcmp.eq.s32.totalorder %v47, %v344
    %vm353 = vcmp.eq.s32.totalorder %v48, %v340
    %vm354 = vcmp.eq.s32.totalorder %v48, %v344
    %vm355 = vcmp.eq.s32.totalorder %v49, %v340
    %vm356 = vcmp.eq.s32.totalorder %v49, %v344
    %vm357 = vcmp.eq.s32.totalorder %v50, %v340
    %vm358 = vcmp.eq.s32.totalorder %v50, %v344
    %vm359 = vcmp.eq.s32.totalorder %v51, %v340
    %vm360 = vcmp.eq.s32.totalorder %v51, %v344
    %vm361 = vcmp.eq.s32.totalorder %v52, %v340
    %vm362 = vcmp.eq.s32.totalorder %v52, %v344
    %vm363 = vcmp.eq.s32.totalorder %v53, %v340
    %vm364 = vcmp.eq.s32.totalorder %v53, %v344
    %vm365 = vcmp.eq.s32.totalorder %v54, %v340
    %vm366 = vcmp.eq.s32.totalorder %v54, %v344
    %vm367 = vcmp.eq.s32.totalorder %v55, %v340
    %vm368 = vcmp.eq.s32.totalorder %v55, %v344
    %vm369 = vcmp.eq.s32.totalorder %v56, %v340
    %vm370 = vcmp.eq.s32.totalorder %v56, %v344
    %vm371 = vcmp.eq.s32.totalorder %v57, %v340
    %vm372 = vcmp.eq.s32.totalorder %v57, %v344
    %vm373 = vcmp.eq.s32.totalorder %v58, %v340
    %vm374 = vcmp.eq.s32.totalorder %v58, %v344
    %vm375 = vcmp.eq.s32.totalorder %v59, %v340
    %vm376 = vcmp.eq.s32.totalorder %v59, %v344
    %v377 = vsel %vm345, 1, 0
    %v378 = vsel %vm346, 1, 0
    %v379 = vsel %vm347, 1, 0
    %v380 = vsel %vm348, 1, 0
    %v381 = vsel %vm349, 1, 0
    %v382 = vsel %vm350, 1, 0
    %v383 = vsel %vm351, 1, 0
    %v384 = vsel %vm352, 1, 0
    %v385 = vsel %vm353, 1, 0
    %v386 = vsel %vm354, 1, 0
    %v387 = vsel %vm355, 1, 0
    %v388 = vsel %vm356, 1, 0
    %v389 = vsel %vm357, 1, 0
    %v390 = vsel %vm358, 1, 0
    %v391 = vsel %vm359, 1, 0
    %v392 = vsel %vm360, 1, 0
    %v393 = vsel %vm361, 1, 0
    %v394 = vsel %vm362, 1, 0
    %v395 = vsel %vm363, 1, 0
    %v396 = vsel %vm364, 1, 0
    %v397 = vsel %vm365, 1, 0
    %v398 = vsel %vm366, 1, 0
    %v399 = vsel %vm367, 1, 0
    %v400 = vsel %vm368, 1, 0
    %v401 = vsel %vm369, 1, 0
    %v402 = vsel %vm370, 1, 0
    %v403 = vsel %vm371, 1, 0
    %v404 = vsel %vm372, 1, 0
    %v405 = vsel %vm373, 1, 0
    %v406 = vsel %vm374, 1, 0
    %v407 = vsel %vm375, 1, 0
    %v408 = vsel %vm376, 1, 0
    %v409 = vcvt.s32.f32 %v377
    %v410 = vcvt.s32.f32 %v378
    %v411 = vcvt.s32.f32 %v379
    %v412 = vcvt.s32.f32 %v380
    %v413 = vcvt.s32.f32 %v381
    %v414 = vcvt.s32.f32 %v382
    %v415 = vcvt.s32.f32 %v383
    %v416 = vcvt.s32.f32 %v384
    %v417 = vcvt.s32.f32 %v385
    %v418 = vcvt.s32.f32 %v386
    %v419 = vcvt.s32.f32 %v387
    %v420 = vcvt.s32.f32 %v388
    %v421 = vcvt.s32.f32 %v389
    %v422 = vcvt.s32.f32 %v390
    %v423 = vcvt.s32.f32 %v391
    %v424 = vcvt.s32.f32 %v392
    %v425 = vcvt.s32.f32 %v393
    %v426 = vcvt.s32.f32 %v394
    %v427 = vcvt.s32.f32 %v395
    %v428 = vcvt.s32.f32 %v396
    %v429 = vcvt.s32.f32 %v397
    %v430 = vcvt.s32.f32 %v398
    %v431 = vcvt.s32.f32 %v399
    %v432 = vcvt.s32.f32 %v400
    %v433 = vcvt.s32.f32 %v401
    %v434 = vcvt.s32.f32 %v402
    %v435 = vcvt.s32.f32 %v403
    %v436 = vcvt.s32.f32 %v404
    %v437 = vcvt.s32.f32 %v405
    %v438 = vcvt.s32.f32 %v406
    %v439 = vcvt.s32.f32 %v407
    %v440 = vcvt.s32.f32 %v408
    %v441 = vadd.f32 %v303, %v409
    %v442 = vadd.f32 %v304, %v410
    %v443 = vadd.f32 %v305, %v411
    %v444 = vadd.f32 %v306, %v412
    %v445 = vadd.f32 %v307, %v413
    %v446 = vadd.f32 %v308, %v414
    %v447 = vadd.f32 %v309, %v415
    %v448 = vadd.f32 %v310, %v416
    %v449 = vadd.f32 %v311, %v417
    %v450 = vadd.f32 %v312, %v418
    %v451 = vadd.f32 %v313, %v419
    %v452 = vadd.f32 %v314, %v420
    %v453 = vadd.f32 %v315, %v421
    %v454 = vadd.f32 %v316, %v422
    %v455 = vadd.f32 %v317, %v423
    %v456 = vadd.f32 %v318, %v424
    %v457 = vadd.f32 %v319, %v425
    %v458 = vadd.f32 %v320, %v426
    %v459 = vadd.f32 %v321, %v427
    %v460 = vadd.f32 %v322, %v428
    %v461 = vadd.f32 %v323, %v429
    %v462 = vadd.f32 %v324, %v430
    %v463 = vadd.f32 %v325, %v431
    %v464 = vadd.f32 %v326, %v432
    %v465 = vadd.f32 %v327, %v433
    %v466 = vadd.f32 %v328, %v434
    %v467 = vadd.f32 %v329, %v435
    %v468 = vadd.f32 %v330, %v436
    %v469 = vadd.f32 %v331, %v437
    %v470 = vadd.f32 %v332, %v438
    %v471 = vadd.f32 %v333, %v439
    %v472 = vadd.f32 %v334, %v440
    %v473 = vld [vmem:[#allocation6] sm:$0xf]
    %v474 = vld [vmem:[#allocation6 + $0x4] sm:$0xf]
    %v475 = vld [vmem:[#allocation6 + $0x8] sm:$0xf]
    %v476 = vld [vmem:[#allocation6 + $0xc] sm:$0xf]
    %v477 = vld [vmem:[#allocation6 + $0x10] sm:$0xf]
    %v478 = vld [vmem:[#allocation6 + $0x14] sm:$0xf]
    %v479 = vld [vmem:[#allocation6 + $0x18] sm:$0xf]
    %v480 = vpack.c.bf16 %v443, %v441
    %v481 = vpack.c.bf16 %v444, %v442
    %v482 = vpack.c.bf16 %v447, %v445
    %v483 = vpack.c.bf16 %v448, %v446
    %v484 = vpack.c.bf16 %v451, %v449
    %v485 = vpack.c.bf16 %v452, %v450
    %v486 = vpack.c.bf16 %v455, %v453
    %v487 = vpack.c.bf16 %v456, %v454
    %v488 = vpack.c.bf16 %v459, %v457
    %v489 = vpack.c.bf16 %v460, %v458
    %v490 = vpack.c.bf16 %v463, %v461
    %v491 = vpack.c.bf16 %v464, %v462
    %v492 = vpack.c.bf16 %v467, %v465
    %v493 = vpack.c.bf16 %v468, %v466
    %v494 = vpack.c.bf16 %v471, %v469
    %v495 = vpack.c.bf16 %v472, %v470
    %v503 = vunpack.c.l.b16 %v473
    %v504 = vunpack.c.l.b16 %v474
    %v505 = vunpack.c.l.b16 %v475
    %v506 = vunpack.c.l.b16 %v476
    %v507 = vunpack.c.l.b16 %v477
    %v508 = vunpack.c.l.b16 %v478
    %v509 = vunpack.c.l.b16 %v479
    %v510 = vpack.c.b16 %v504, %v503
    %v511 = vpack.c.b16 %v506, %v505
    %v512 = vpack.c.b16 %v508, %v507
    %v513 = vpack.c.b16 %v509, %v509
    %518 = vmatprep.subr.bf16.mxu0 %v481
    %519 = vmatpush1.bf16.msra.mxu0 %v480
    %520 = vmatprep.subr.bf16.mxu0 %v483
    %521 = vmatpush1.bf16.msra.mxu0 %v482
    %522 = vmatprep.subr.bf16.mxu0 %v485
    %523 = vmatpush1.bf16.msra.mxu0 %v484
    %524 = vmatprep.subr.bf16.mxu0 %v487
    %525 = vmatpush1.bf16.msra.mxu0 %v486
    %526 = vmatprep.subr.bf16.mxu0 %v489
    %527 = vmatpush1.bf16.msra.mxu0 %v488
    %528 = vmatprep.subr.bf16.mxu0 %v491
    %529 = vmatpush1.bf16.msra.mxu0 %v490
    %530 = vmatprep.subr.bf16.mxu0 %v493
    %531 = vmatpush1.bf16.msra.mxu0 %v492
    %532 = vmatprep.subr.bf16.mxu0 %v495
    %533 = vmatpush1.bf16.msra.mxu0 %v494
    %534 = vmatprep.subr.bf16.mxu0 0
    %535 = vmatpush1.bf16.msra.mxu0 0
    %536 = vmatprep.subr.bf16.mxu0 0
    %537 = vmatpush1.bf16.msra.mxu0 0
    %538 = vmatprep.subr.bf16.mxu0 0
    %539 = vmatpush1.bf16.msra.mxu0 0
    %540 = vmatprep.subr.bf16.mxu0 0
    %541 = vmatpush1.bf16.msra.mxu0 0
    %542 = vmatprep.subr.bf16.mxu0 0
    %543 = vmatpush1.bf16.msra.mxu0 0
    %544 = vmatprep.subr.bf16.mxu0 0
    %545 = vmatpush1.bf16.msra.mxu0 0
    %546 = vmatprep.subr.bf16.mxu0 0
    %547 = vmatpush1.bf16.msra.mxu0 0
    %548 = vmatprep.subr.bf16.mxu0 0
    %549 = vmatpush1.bf16.msra.mxu0 0
    %550 = vmatprep.mubr.bf16.mxu0 0
    %551 = vmatmul.mubr.bf16.gmra.mrb[0].mxu0 %v510
    %v552 = vpop.f32.mrb[0].mxu0
    %v553 = vadd.f32 0.0, %v552
    %v554 = vpop.f32.mrb[0].mxu0
    %v555 = vadd.f32 0.0, %v554
    %v556 = vpop.f32.mrb[0].mxu0
    %v557 = vadd.f32 0.0, %v556
    %v558 = vpop.f32.mrb[0].mxu0
    %v559 = vadd.f32 0.0, %v558
    %560 = vmatprep.mubr.bf16.mxu0 0
    %561 = vmatmul.mubr.bf16.gmra.mrb[0].mxu0 %v511
    %v562 = vpop.f32.mrb[0].mxu0
    %v563 = vadd.f32 0.0, %v562
    %v564 = vpop.f32.mrb[0].mxu0
    %v565 = vadd.f32 0.0, %v564
    %v566 = vpop.f32.mrb[0].mxu0
    %v567 = vadd.f32 0.0, %v566
    %v568 = vpop.f32.mrb[0].mxu0
    %v569 = vadd.f32 0.0, %v568
    %570 = vmatprep.mubr.bf16.mxu0 0
    %571 = vmatmul.mubr.bf16.gmra.mrb[0].mxu0 %v512
    %v572 = vpop.f32.mrb[0].mxu0
    %v573 = vadd.f32 0.0, %v572
    %v574 = vpop.f32.mrb[0].mxu0
    %v575 = vadd.f32 0.0, %v574
    %v576 = vpop.f32.mrb[0].mxu0
    %v577 = vadd.f32 0.0, %v576
    %v578 = vpop.f32.mrb[0].mxu0
    %v579 = vadd.f32 0.0, %v578
    %580 = vmatprep.mubr.bf16.mxu0 0
    %581 = vmatmul.mubr.bf16.gmra.mrb[0].mxu0 %v513
    %v582 = vpop.f32.mrb[0].mxu0
    %v583 = vadd.f32 0.0, %v582
    %v584 = vpop.f32.mrb[0].mxu0
    %v585 = vadd.f32 0.0, %v584
    %v586 = vpop.f32.mrb[0].mxu0
    %v587 = vpop.f32.mrb[0].mxu0
    %588 = vdwg.mxu0
    %v589 = vadd.f32 %v563, %v573
    %v590 = vadd.f32 %v565, %v575
    %v591 = vadd.f32 %v567, %v577
    %v592 = vadd.f32 %v569, %v579
    %v593 = vmul.f32 %v553, %v553
    %v594 = vmul.f32 %v555, %v555
    %v595 = vmul.f32 %v557, %v557
    %v596 = vmul.f32 %v559, %v559
    %v597 = vsub.f32 %v593, %v589
    %v598 = vsub.f32 %v594, %v590
    %v599 = vsub.f32 %v595, %v591
    %v600 = vsub.f32 %v596, %v592
    %v601 = vadd.f32 %v597, %v599
    %v602 = vrot.slane %v601, 4
    %v603 = vadd.f32 %v601, %v602
    %v604 = vrot.slane %v603, 2
    %v605 = vadd.f32 %v603, %v604
    %v606 = vrot.slane %v605, 1
    %v607 = vadd.f32 %v605, %v606
    %v608 = vadd.f32 %v598, %v600
    %v609 = vrot.slane %v608, 4
    %v610 = vadd.f32 %v608, %v609
    %v611 = vrot.slane %v610, 2
    %v612 = vadd.f32 %v610, %v611
    %v613 = vrot.slane %v612, 1
    %v614 = vadd.f32 %v612, %v613
    %v615 = vmul.f32 %v607, 0.5
    %v616 = vmul.f32 %v614, 0.5
    %vm617 = vcmask 1042432
    %v618 = vsel %vm617, %v583, 0.0
    %v619 = vrot.slane %v618, 4
    %v620 = vadd.f32 %v618, %v619
    %v621 = vrot.slane %v620, 2
    %v622 = vadd.f32 %v620, %v621
    %v623 = vrot.slane %v622, 1
    %v624 = vadd.f32 %v622, %v623
    %v625 = vsel %vm617, %v585, 0.0
    %v626 = vrot.slane %v625, 4
    %v627 = vadd.f32 %v625, %v626
    %v628 = vrot.slane %v627, 2
    %v629 = vadd.f32 %v627, %v628
    %v630 = vrot.slane %v629, 1
    %v631 = vadd.f32 %v629, %v630
    %v632 = vadd.f32 %v624, %v615
    %v633 = vadd.f32 %v631, %v616
    %s634 = sld [smem:[#allocation2]]
    %v635 = vstv %s634
    %v636 = vadd.f32 %v632, %v635
    %v637 = vadd.f32 %v633, %v635
    %v640 = vcombine.low %v636, %v637
    %v642 = vunpack.c.l.s4 1966171168
    %v643 = vunpack.c.0.s8 %v642
    %v644 = vlaneseq
    %v645 = vshrl.u32 %v644, 7
    %v646 = vsub.s32 %v643, %v645
    %v647 = vrot.slane %v640, %v646
    %v649 = vunpack.c.l.s4 1966171168
    %v650 = vunpack.c.0.s8 %v649
    %v651 = vlaneseq
    %v652 = vshrl.u32 %v651, 7
    %v653 = vsub.s32 %v650, %v652
    %v654 = vrot.slane %v647, %v653
    %v656 = vlaneseq
    %vm657 = vcmp.ge.s32.totalorder %v656, 0
    %vm658 = vcmp.lt.s32.totalorder %v656, 256
    %vm659 = vmand %vm657, %vm658
    %660 = vst.msk [vmem:[#allocation8] sm:$0x3] %vm659, %v654
    // Predicated region
    $region22: #{tpu_custom_call.1} parent=1 // pred_check
      _
    $region23: #{tpu_custom_call.1} parent=1 // pred_check_branch
      %662 = sbr.rel (0) target = $region25
    $region24: #{tpu_custom_call.1} parent=1 // pred_region
      %s664 = ssub.s32 32, 32
      %665 = vsyncadd [#allocation5], %s664
      %s667 = sshll.u32 [#allocation8], 4
      %s668 = int_to_ptr.vmem [resolvable:$true] %s667
      %670 = dma.vmem_to_hbm [thread:$0]  %s668, 32, %s3, [#allocation5]
    $region25: #{tpu_custom_call.1} parent=1 // pred_fallthru
      _
    // Predicated region
    $region26: #{tpu_custom_call.1} parent=1 // pred_check
      _
    $region27: #{tpu_custom_call.1} parent=1 // pred_check_branch
      %672 = sbr.rel (0) target = $region29
    $region28: #{tpu_custom_call.1} parent=1 // pred_region
      %673 = dma.done [#allocation5], 32
    $region29: #{tpu_custom_call.1} parent=1 // pred_fallthru
      _
    %674 = vsyncpa [#allocation4], 1
    %675 = vsyncpa [#allocation7], 1
    %676 = vsyncpa [#allocation5], 1

</llo_original>
